<compile_context>
chip_gen: v6e
topology: v6e:2x2x1
jax: 0.10.0
libtpu: 0.0.40
codegen_flags: <defaults>
</compile_context>

<pallas_src>
import numpy as np
import jax
import jax.numpy as jnp
from jax.experimental import pallas as pl
from jax.experimental.pallas import tpu as pltpu


def _round_up(x: int, m: int) -> int:
    return ((x + m - 1) // m) * m


# ----------------------------------------------------------------------------
# Pallas kernel: fused windowed-DFT analysis for ALL buckets as one MXU matmul.
#   X     : (N, K) = (batch*nb_slices, sl_len)          rows = slices (bf16)
#   BASIS : (K, P) = (sl_len, sum_i F_i*M_i*2)          packed (f, m, re/im)
#   OUT   : (N, P) = X @ BASIS                          f32 MXU accumulation
# ----------------------------------------------------------------------------
def _slicq_matmul_kernel(x_ref, basis_ref, o_ref):
    o_ref[...] = jnp.dot(
        x_ref[...], basis_ref[...], preferred_element_type=jnp.float32
    )


def slicq_fused_matmul(x2: jax.Array, basis: jax.Array, *, tile_n: int = 1024) -> jax.Array:
    """(N, K) @ (K, P) -> (N, P) f32, tiled over N with a parallel grid axis."""
    N, K = x2.shape
    K2, P = basis.shape
    assert K == K2

    # Tile rows; multiple of 16 keeps bf16 sublane packing happy, and the
    # default 1024-row tile stays well under v7x's 64 MiB VMEM:
    #   2*(1024*32 + 1024*768*2)*2B + 32*768*2B  ~= 6.3 MiB double-buffered.
    tn = min(int(tile_n), _round_up(N, 16))
    n_pad = _round_up(N, tn)
    if n_pad != N:
        x2 = jnp.pad(x2, ((0, n_pad - N), (0, 0)))

    grid = (n_pad // tn,)
    in_itemsize = jnp.dtype(x2.dtype).itemsize
    cost = pl.CostEstimate(
        flops=2 * n_pad * K * P,
        transcendentals=0,
        bytes_accessed=n_pad * K * in_itemsize + K * P * in_itemsize + n_pad * P * 4,
    )

    out = pl.pallas_call(
        _slicq_matmul_kernel,
        out_shape=jax.ShapeDtypeStruct((n_pad, P), jnp.float32),
        grid=grid,
        in_specs=[
            pl.BlockSpec((tn, K), lambda i: (i, 0)),   # row tile of X
            pl.BlockSpec((K, P), lambda i: (0, 0)),    # basis resident in VMEM
        ],
        out_specs=pl.BlockSpec((tn, P), lambda i: (i, 0)),
        compiler_params=pltpu.CompilerParams(
            dimension_semantics=("parallel",),         # megacore / v7x 2 TCs
            vmem_limit_bytes=32 * 1024 * 1024,
        ),
        cost_estimate=cost,
    )(x2, basis)

    return out[:N] if n_pad != N else out


# ----------------------------------------------------------------------------
# SliCQT wrapper (synthetic, deterministic NSGT parameters).
# ----------------------------------------------------------------------------
class SliCQTPallas:
    def __init__(self, sl_len=32, buckets=((4, 8), (6, 16), (8, 32)), tile_n=1024):
        self.sl_len = int(sl_len)
        self.hop = self.sl_len // 2
        self.buckets = tuple(buckets)
        self.tile_n = int(tile_n)

        t = np.arange(self.sl_len, dtype=np.float64)
        # Hann slicing window (Tukey-like slice taper in the real transform).
        slice_win = 0.5 - 0.5 * np.cos(2.0 * np.pi * (t + 0.5) / self.sl_len)

        packed_bases = []
        fbin_offset = 0
        for (F, M) in self.buckets:
            f = np.arange(F, dtype=np.float64)[:, None, None] + fbin_offset
            m = np.arange(M, dtype=np.float64)[None, :, None]
            tt = t[None, None, :]
            phase = 2.0 * np.pi * (f * tt / self.sl_len + m * tt / M)
            base_c = slice_win[None, None, :] * np.exp(-1j * phase) / M
            # pack -> (sl_len, F, M, 2) -> (sl_len, F*M*2), re/im interleaved
            packed = np.stack([base_c.real, base_c.imag], axis=-1)       # (F, M, T, 2)
            packed = np.transpose(packed, (2, 0, 1, 3)).reshape(self.sl_len, F * M * 2)
            packed_bases.append(packed)
            fbin_offset += F

        self.bucket_widths = [F * M * 2 for (F, M) in self.buckets]
        # Fused, lane-dense basis (sl_len, sum F*M*2) in bf16.
        fused = np.concatenate(packed_bases, axis=1)                      # (T, P_total)
        self.basis_all = jnp.asarray(fused, dtype=jnp.bfloat16)

    def _slice_rows(self, x: jax.Array):
        """(S, C, T) -> (S*C*nb_slices, sl_len) via hop-block concat (no gather)."""
        nb_samples, nb_channels, nb_timesteps = x.shape
        n_hops = nb_timesteps // self.hop
        nb_slices = n_hops - 1
        xf = jnp.reshape(x, (-1, nb_timesteps)).astype(jnp.float32)
        xf = xf[:, : n_hops * self.hop]
        xh = jnp.reshape(xf, (-1, n_hops, self.hop))                      # (B, H, hop)
        x_slices = jnp.concatenate([xh[:, :-1, :], xh[:, 1:, :]], axis=-1)  # (B, S, 2*hop)
        return jnp.reshape(x_slices, (-1, self.sl_len)), nb_slices

    def forward(self, x: jax.Array):
        nb_samples, nb_channels, _ = x.shape
        x2, nb_slices = self._slice_rows(x)
        x2 = x2.astype(jnp.bfloat16)

        out2 = slicq_fused_matmul(x2, self.basis_all, tile_n=self.tile_n)  # (N, P_total) f32

        C = []
        off = 0
        for (F, M), w in zip(self.buckets, self.bucket_widths):
            out = jnp.reshape(
                out2[:, off : off + w],
                (nb_samples, nb_channels, nb_slices, F, M, 2),
            )
            # match torch: moveaxis(slices, 0, -2) + view_as_real + leading reshape
            out = jnp.transpose(out, (0, 1, 3, 2, 4, 5))  # (S, C, F, slices, M, 2)
            C.append(out)
            off += w
        return C


# ----------------------------------------------------------------------------
# Reference (float64 numpy, same bf16-quantised inputs) for correctness check.
# ----------------------------------------------------------------------------
def _reference_forward(slicqt: SliCQTPallas, x: jax.Array):
    x_np = np.asarray(x, dtype=np.float64)
    nb_samples, nb_channels, nb_timesteps = x_np.shape
    hop, sl_len = slicqt.hop, slicqt.sl_len
    n_hops = nb_timesteps // hop
    nb_slices = n_hops - 1

    xf = x_np.reshape(-1, nb_timesteps)[:, : n_hops * hop]
    xh = xf.reshape(-1, n_hops, hop)
    x2 = np.concatenate([xh[:, :-1, :], xh[:, 1:, :]], axis=-1).reshape(-1, sl_len)
    # apply the same bf16 quantisation as the kernel inputs
    x2_q = np.asarray(jnp.asarray(x2, dtype=jnp.bfloat16).astype(jnp.float32),
                      dtype=np.float64)
    basis = np.asarray(slicqt.basis_all.astype(jnp.float32), dtype=np.float64)

    out2 = x2_q @ basis
    refs = []
    off = 0
    for (F, M), w in zip(slicqt.buckets, slicqt.bucket_widths):
        o = out2[:, off : off + w].reshape(nb_samples, nb_channels, nb_slices, F, M, 2)
        refs.append(np.transpose(o, (0, 1, 3, 2, 4, 5)))
        off += w
    return refs, nb_slices


if __name__ == "__main__":
    key = jax.random.PRNGKey(0)
    nb_samples, nb_channels, nb_timesteps = 2, 2, 144
    x = jax.random.normal(key, (nb_samples, nb_channels, nb_timesteps), dtype=jnp.float32)

    slicqt = SliCQTPallas(sl_len=32, buckets=((4, 8), (6, 16), (8, 32)))
    C = slicqt.forward(x)
    C = [jax.block_until_ready(c) for c in C]

    refs, nb_slices = _reference_forward(slicqt, x)
    for (F, M), c, r in zip(slicqt.buckets, C, refs):
        assert c.shape == (nb_samples, nb_channels, F, nb_slices, M, 2), c.shape
        assert c.dtype == jnp.float32
        np.testing.assert_allclose(np.asarray(c), r, rtol=1e-3, atol=1e-5)

    print("KERNEL_OK")
</pallas_src>

<mosaic_0001>
module attributes {stable_mosaic.version = 11 : i64} {
  func.func @_slicq_matmul_kernel(%arg0: i32, %arg1: memref<32x32xbf16, #tpu.memory_space<vmem>>, %arg2: memref<32x768xbf16, #tpu.memory_space<vmem>>, %arg3: memref<32x768xf32, #tpu.memory_space<vmem>>) attributes {dimension_semantics = [#tpu.dimension_semantics<parallel>], iteration_bounds = array<i64: 1>, scalar_prefetch = 0 : i64, scratch_operands = 0 : i64, tpu.core_type = #tpu.core_type<tc>, window_params = [{transform_indices = @transform_0, window_bounds = array<i64: 32, 32>}, {pipeline_mode = #tpu.pipeline_mode<synchronous>, transform_indices = @transform_1, window_bounds = array<i64: 32, 768>}, {transform_indices = @transform_2, window_bounds = array<i64: 32, 768>}]} {
    %c0 = arith.constant 0 : index
    %c0_0 = arith.constant 0 : index
    %0 = vector.load %arg1[%c0, %c0_0] : memref<32x32xbf16, #tpu.memory_space<vmem>>, vector<32x32xbf16>
    %c0_1 = arith.constant 0 : index
    %c0_2 = arith.constant 0 : index
    %1 = vector.load %arg2[%c0_1, %c0_2] : memref<32x768xbf16, #tpu.memory_space<vmem>>, vector<32x768xbf16>
    %cst = arith.constant dense<0.000000e+00> : vector<32x768xf32>
    %2 = tpu.matmul %0, %1, %cst {dimension_numbers = #tpu.dot_dimension_numbers<[1], [0], [0], [1], [0, 0, 1, 1], [], []>} : vector<32x32xbf16>, vector<32x768xbf16>, vector<32x768xf32> -> vector<32x768xf32>
    %c0_3 = arith.constant 0 : index
    %c0_4 = arith.constant 0 : index
    %3 = vector.load %arg3[%c0_3, %c0_4] : memref<32x768xf32, #tpu.memory_space<vmem>>, vector<32x768xf32>
    tpu.vector_store %arg3[%c0_3, %c0_4], %2 {strides = array<i32>} : memref<32x768xf32, #tpu.memory_space<vmem>>, vector<32x768xf32>,
    return
  }
  func.func @transform_0(%arg0: i32) -> (i32, i32) {
    %c0_i32 = arith.constant 0 : i32
    %c0_i32_0 = arith.constant 0 : i32
    return %arg0, %c0_i32 : i32, i32
  }
  func.func @transform_1(%arg0: i32) -> (i32, i32) {
    %c0_i32 = arith.constant 0 : i32
    %c0_i32_0 = arith.constant 0 : i32
    %c0_i32_1 = arith.constant 0 : i32
    return %c0_i32, %c0_i32_0 : i32, i32
  }
  func.func @transform_2(%arg0: i32) -> (i32, i32) {
    %c0_i32 = arith.constant 0 : i32
    %c0_i32_0 = arith.constant 0 : i32
    return %arg0, %c0_i32 : i32, i32
  }
}

</mosaic_0001>

<llo_original>
// kernel: tpu_custom_call.1
$region0: #{tpu_custom_call.1}
  #allocation0 [shape = 'u32[]', space=smem, size = 0x4, offset = 0x4, fixed_abs, tag = 'smem constant byte address 0x4 - core index']
  #allocation1 [shape = 'u32[144,128]{1,0:T(1,128)}', space=vmem, size = 0x12000, scoped, tag = 'internal scratch']
  %s0 = inlined_call_operand.hbm [shape: bf16[32,32], index: 0, kind: input, shape index: {}]
  %s1 = inlined_call_operand.hbm [shape: bf16[32,768], index: 1, kind: input, shape index: {}]
  %s2 = inlined_call_operand.hbm [shape: f32[32,768], index: 2, kind: output, shape index: {}]
  %s3 = sld [smem:[#allocation0]]
  $region26: #{tpu_custom_call.1} parent=0
    _
  %s5 = ssub.s32 1, %s3
  %s6 = scalar_select 0, %s5, %s3
  $region1: #{tpu_custom_call.1} parent=0
    #allocation2 [shape = 'u8[8192]{0}', space=vmem, size = 0x2000, scoped, tag = 'input window, operand 0, single buffered']
    #allocation3 [shape = 's32[1]{0}', space=sflag, size = 0x4, scoped, tag = 'scoped memory for tpu_custom_call.1']
    #allocation4 [shape = 's32[1]{0}', space=sflag, size = 0x4, scoped, tag = 'scoped memory for tpu_custom_call.1']
    #allocation5 [shape = 'u8[49152]{0}', space=vmem, size = 0xc000, scoped, tag = 'input window, operand 1, single buffered']
    #allocation6 [shape = 's32[1]{0}', space=sflag, size = 0x4, scoped, tag = 'scoped memory for tpu_custom_call.1']
    #allocation7 [shape = 'u8[98304]{0}', space=vmem, size = 0x18000, scoped, tag = 'output window, operand 0, single buffered']
    %7 = vsyncpa [#allocation3], 0
    %8 = vsyncpa [#allocation6], 0
    %9 = vsyncpa [#allocation4], 0
    // Predicated region
    $region2: #{tpu_custom_call.1} parent=1 // pred_check
      _
    $region3: #{tpu_custom_call.1} parent=1 // pred_check_branch
      %11 = sbr.rel (0) target = $region5
    $region4: #{tpu_custom_call.1} parent=1 // pred_region
      %s13 = ssub.s32 256, 256
      %14 = vsyncadd [#allocation3], %s13
      %s15 = sshll.u32 [#allocation2], 4
      %s16 = int_to_ptr.vmem [resolvable:$true] %s15
      %21 = dma.hbm_to_vmem [thread:$0]  %s0, 256, %s16, [#allocation3], 64, 64, 4
    $region5: #{tpu_custom_call.1} parent=1 // pred_fallthru
      _
    // Predicated region
    $region6: #{tpu_custom_call.1} parent=1 // pred_check
      _
    $region7: #{tpu_custom_call.1} parent=1 // pred_check_branch
      %23 = sbr.rel (0) target = $region9
    $region8: #{tpu_custom_call.1} parent=1 // pred_region
      %s25 = ssub.s32 1536, 1536
      %26 = vsyncadd [#allocation6], %s25
      %s27 = sshll.u32 [#allocation5], 4
      %s28 = int_to_ptr.vmem [resolvable:$true] %s27
      %33 = dma.hbm_to_vmem [thread:$0]  %s1, 1536, %s28, [#allocation6], 384, 384, 24
    $region9: #{tpu_custom_call.1} parent=1 // pred_fallthru
      _
    // Predicated region
    $region10: #{tpu_custom_call.1} parent=1 // pred_check
      _
    $region11: #{tpu_custom_call.1} parent=1 // pred_check_branch
      %35 = sbr.rel (0) target = $region13
    $region12: #{tpu_custom_call.1} parent=1 // pred_region
      %36 = dma.done [#allocation3], 256
    $region13: #{tpu_custom_call.1} parent=1 // pred_fallthru
      _
    // Predicated region
    $region14: #{tpu_custom_call.1} parent=1 // pred_check
      _
    $region15: #{tpu_custom_call.1} parent=1 // pred_check_branch
      %38 = sbr.rel (0) target = $region17
    $region16: #{tpu_custom_call.1} parent=1 // pred_region
      %39 = dma.done [#allocation6], 1536
    $region17: #{tpu_custom_call.1} parent=1 // pred_fallthru
      _
    %v41 = vld [vmem:[#allocation2] sm:$0xf]
    %v42 = vld [vmem:[#allocation2 + $0x4] sm:$0xf]
    %v43 = vld [vmem:[#allocation2 + $0x8] sm:$0xf]
    %v44 = vld [vmem:[#allocation2 + $0xc] sm:$0xf]
    %v45 = vld [vmem:[#allocation5] sm:$0xff]
    %v46 = vld [vmem:[#allocation5 + $0x8] sm:$0xff]
    %v47 = vld [vmem:[#allocation5 + $0x10] sm:$0xff]
    %v48 = vld [vmem:[#allocation5 + $0x18] sm:$0xff]
    %v49 = vld [vmem:[#allocation5 + $0x20] sm:$0xff]
    %v50 = vld [vmem:[#allocation5 + $0x28] sm:$0xff]
    %v51 = vld [vmem:[#allocation5 + $0x30] sm:$0xff]
    %v52 = vld [vmem:[#allocation5 + $0x38] sm:$0xff]
    %v53 = vld [vmem:[#allocation5 + $0x40] sm:$0xff]
    %v54 = vld [vmem:[#allocation5 + $0x48] sm:$0xff]
    %v55 = vld [vmem:[#allocation5 + $0x50] sm:$0xff]
    %v56 = vld [vmem:[#allocation5 + $0x58] sm:$0xff]
    %v61 = vunpack.c.l.b16 %v41
    %v62 = vunpack.c.l.b16 %v42
    %v63 = vunpack.c.l.b16 %v43
    %v64 = vunpack.c.l.b16 %v44
    %v65 = vpack.c.b16 %v62, %v61
    %v66 = vpack.c.b16 %v64, %v63
    %v79 = vunpack.c.l.b16 %v45
    %v80 = vunpack.c.h.b16 %v45
    %v81 = vunpack.c.l.b16 %v46
    %v82 = vunpack.c.h.b16 %v46
    %v83 = vunpack.c.l.b16 %v47
    %v84 = vunpack.c.h.b16 %v47
    %v85 = vunpack.c.l.b16 %v48
    %v86 = vunpack.c.h.b16 %v48
    %v87 = vunpack.c.l.b16 %v49
    %v88 = vunpack.c.h.b16 %v49
    %v89 = vunpack.c.l.b16 %v50
    %v90 = vunpack.c.h.b16 %v50
    %v91 = vunpack.c.l.b16 %v51
    %v92 = vunpack.c.h.b16 %v51
    %v93 = vunpack.c.l.b16 %v52
    %v94 = vunpack.c.h.b16 %v52
    %v95 = vunpack.c.l.b16 %v53
    %v96 = vunpack.c.h.b16 %v53
    %v97 = vunpack.c.l.b16 %v54
    %v98 = vunpack.c.h.b16 %v54
    %v99 = vunpack.c.l.b16 %v55
    %v100 = vunpack.c.h.b16 %v55
    %v101 = vunpack.c.l.b16 %v56
    %v102 = vunpack.c.h.b16 %v56
    %v103 = vpack.c.b16 %v85, %v79
    %v104 = vpack.c.b16 %v86, %v80
    %v105 = vpack.c.b16 %v87, %v81
    %v106 = vpack.c.b16 %v88, %v82
    %v107 = vpack.c.b16 %v89, %v83
    %v108 = vpack.c.b16 %v90, %v84
    %v109 = vpack.c.b16 %v97, %v91
    %v110 = vpack.c.b16 %v98, %v92
    %v111 = vpack.c.b16 %v99, %v93
    %v112 = vpack.c.b16 %v100, %v94
    %v113 = vpack.c.b16 %v101, %v95
    %v114 = vpack.c.b16 %v102, %v96
    %vm127 = vcmask 261120
    %v129 = vsel %vm127, %v65, 0
    %v132 = vsel %vm127, %v66, 0
    %134 = vmatprep.subr.bf16.mxu0 0
    %135 = vmatpush1.bf16.msra.mxu0 0
    %136 = vmatprep.subr.bf16.mxu0 0
    %137 = vmatpush1.bf16.msra.mxu0 0
    %138 = vmatprep.subr.bf16.mxu0 0
    %139 = vmatpush1.bf16.msra.mxu0 0
    %140 = vmatprep.subr.bf16.mxu0 0
    %141 = vmatpush1.bf16.msra.mxu0 0
    %142 = vmatprep.subr.bf16.mxu0 0
    %143 = vmatpush1.bf16.msra.mxu0 0
    %144 = vmatprep.subr.bf16.mxu0 0
    %145 = vmatpush1.bf16.msra.mxu0 0
    %146 = vmatprep.subr.bf16.mxu0 %v110
    %147 = vmatpush1.bf16.msra.mxu0 %v109
    %148 = vmatprep.subr.bf16.mxu0 %v104
    %149 = vmatpush1.bf16.msra.mxu0 %v103
    %150 = vmatprep.subr.bf16.mxu0 0
    %151 = vmatpush2.bf16.msra.mxu0 0
    %152 = vmatprep.subr.bf16.mxu0 0
    %153 = vmatpush2.bf16.msra.mxu0 0
    %154 = vmatprep.subr.bf16.mxu0 0
    %155 = vmatpush2.bf16.msra.mxu0 0
    %156 = vmatprep.subr.bf16.mxu0 0
    %157 = vmatpush2.bf16.msra.mxu0 0
    %158 = vmatprep.subr.bf16.mxu0 0
    %159 = vmatpush2.bf16.msra.mxu0 0
    %160 = vmatprep.subr.bf16.mxu0 0
    %161 = vmatpush2.bf16.msra.mxu0 0
    %162 = vmatprep.subr.bf16.mxu0 0
    %163 = vmatpush2.bf16.msra.mxu0 0
    %164 = vmatprep.subr.bf16.mxu0 0
    %165 = vmatpush2.bf16.msra.mxu0 0
    %166 = vmatprep.mubr.bf16.mxu0 0
    %167 = vmatmul.mubr.bf16.gmra.mxu0 %v129
    %v168 = vpop.f32.mrf.mxu0
    %v169 = vadd.f32 0.0, %v168
    %v170 = vpop.f32.mrf.mxu0
    %v171 = vadd.f32 0.0, %v170
    %v172 = vpop.f32.mrf.mxu0
    %v173 = vadd.f32 0.0, %v172
    %v174 = vpop.f32.mrf.mxu0
    %v175 = vadd.f32 0.0, %v174
    %176 = vmatprep.mubr.bf16.mxu0 0
    %177 = vmatmul.mubr.bf16.gmra.mxu0 %v132
    %v178 = vpop.f32.mrf.mxu0
    %v179 = vadd.f32 0.0, %v178
    %v180 = vpop.f32.mrf.mxu0
    %v181 = vadd.f32 0.0, %v180
    %v182 = vpop.f32.mrf.mxu0
    %v183 = vadd.f32 0.0, %v182
    %v184 = vpop.f32.mrf.mxu0
    %v185 = vadd.f32 0.0, %v184
    %186 = vdwg.mxu0
    %187 = vmatprep.subr.bf16.mxu0 0
    %188 = vmatpush1.bf16.msra.mxu0 0
    %189 = vmatprep.subr.bf16.mxu0 0
    %190 = vmatpush1.bf16.msra.mxu0 0
    %191 = vmatprep.subr.bf16.mxu0 0
    %192 = vmatpush1.bf16.msra.mxu0 0
    %193 = vmatprep.subr.bf16.mxu0 0
    %194 = vmatpush1.bf16.msra.mxu0 0
    %195 = vmatprep.subr.bf16.mxu0 0
    %196 = vmatpush1.bf16.msra.mxu0 0
    %197 = vmatprep.subr.bf16.mxu0 0
    %198 = vmatpush1.bf16.msra.mxu0 0
    %199 = vmatprep.subr.bf16.mxu0 %v112
    %200 = vmatpush1.bf16.msra.mxu0 %v111
    %201 = vmatprep.subr.bf16.mxu0 %v106
    %202 = vmatpush1.bf16.msra.mxu0 %v105
    %203 = vmatprep.subr.bf16.mxu0 0
    %204 = vmatpush2.bf16.msra.mxu0 0
    %205 = vmatprep.subr.bf16.mxu0 0
    %206 = vmatpush2.bf16.msra.mxu0 0
    %207 = vmatprep.subr.bf16.mxu0 0
    %208 = vmatpush2.bf16.msra.mxu0 0
    %209 = vmatprep.subr.bf16.mxu0 0
    %210 = vmatpush2.bf16.msra.mxu0 0
    %211 = vmatprep.subr.bf16.mxu0 0
    %212 = vmatpush2.bf16.msra.mxu0 0
    %213 = vmatprep.subr.bf16.mxu0 0
    %214 = vmatpush2.bf16.msra.mxu0 0
    %215 = vmatprep.subr.bf16.mxu0 0
    %216 = vmatpush2.bf16.msra.mxu0 0
    %217 = vmatprep.subr.bf16.mxu0 0
    %218 = vmatpush2.bf16.msra.mxu0 0
    %219 = vmatprep.mubr.bf16.mxu0 0
    %220 = vmatmul.mubr.bf16.gmra.mxu0 %v129
    %v221 = vpop.f32.mrf.mxu0
    %v222 = vadd.f32 0.0, %v221
    %v223 = vpop.f32.mrf.mxu0
    %v224 = vadd.f32 0.0, %v223
    %v225 = vpop.f32.mrf.mxu0
    %v226 = vadd.f32 0.0, %v225
    %v227 = vpop.f32.mrf.mxu0
    %v228 = vadd.f32 0.0, %v227
    %229 = vmatprep.mubr.bf16.mxu0 0
    %230 = vmatmul.mubr.bf16.gmra.mxu0 %v132
    %v231 = vpop.f32.mrf.mxu0
    %v232 = vadd.f32 0.0, %v231
    %v233 = vpop.f32.mrf.mxu0
    %v234 = vadd.f32 0.0, %v233
    %v235 = vpop.f32.mrf.mxu0
    %v236 = vadd.f32 0.0, %v235
    %v237 = vpop.f32.mrf.mxu0
    %v238 = vadd.f32 0.0, %v237
    %239 = vdwg.mxu0
    %240 = vmatprep.subr.bf16.mxu0 0
    %241 = vmatpush1.bf16.msra.mxu0 0
    %242 = vmatprep.subr.bf16.mxu0 0
    %243 = vmatpush1.bf16.msra.mxu0 0
    %244 = vmatprep.subr.bf16.mxu0 0
    %245 = vmatpush1.bf16.msra.mxu0 0
    %246 = vmatprep.subr.bf16.mxu0 0
    %247 = vmatpush1.bf16.msra.mxu0 0
    %248 = vmatprep.subr.bf16.mxu0 0
    %249 = vmatpush1.bf16.msra.mxu0 0
    %250 = vmatprep.subr.bf16.mxu0 0
    %251 = vmatpush1.bf16.msra.mxu0 0
    %252 = vmatprep.subr.bf16.mxu0 %v114
    %253 = vmatpush1.bf16.msra.mxu0 %v113
    %254 = vmatprep.subr.bf16.mxu0 %v108
    %255 = vmatpush1.bf16.msra.mxu0 %v107
    %256 = vmatprep.subr.bf16.mxu0 0
    %257 = vmatpush2.bf16.msra.mxu0 0
    %258 = vmatprep.subr.bf16.mxu0 0
    %259 = vmatpush2.bf16.msra.mxu0 0
    %260 = vmatprep.subr.bf16.mxu0 0
    %261 = vmatpush2.bf16.msra.mxu0 0
    %262 = vmatprep.subr.bf16.mxu0 0
    %263 = vmatpush2.bf16.msra.mxu0 0
    %264 = vmatprep.subr.bf16.mxu0 0
    %265 = vmatpush2.bf16.msra.mxu0 0
    %266 = vmatprep.subr.bf16.mxu0 0
    %267 = vmatpush2.bf16.msra.mxu0 0
    %268 = vmatprep.subr.bf16.mxu0 0
    %269 = vmatpush2.bf16.msra.mxu0 0
    %270 = vmatprep.subr.bf16.mxu0 0
    %271 = vmatpush2.bf16.msra.mxu0 0
    %272 = vmatprep.mubr.bf16.mxu0 0
    %273 = vmatmul.mubr.bf16.gmra.mxu0 %v129
    %v274 = vpop.f32.mrf.mxu0
    %v275 = vadd.f32 0.0, %v274
    %v276 = vpop.f32.mrf.mxu0
    %v277 = vadd.f32 0.0, %v276
    %v278 = vpop.f32.mrf.mxu0
    %v279 = vadd.f32 0.0, %v278
    %v280 = vpop.f32.mrf.mxu0
    %v281 = vadd.f32 0.0, %v280
    %282 = vmatprep.mubr.bf16.mxu0 0
    %283 = vmatmul.mubr.bf16.gmra.mxu0 %v132
    %v284 = vpop.f32.mrf.mxu0
    %v285 = vadd.f32 0.0, %v284
    %v286 = vpop.f32.mrf.mxu0
    %v287 = vadd.f32 0.0, %v286
    %v288 = vpop.f32.mrf.mxu0
    %v289 = vadd.f32 0.0, %v288
    %v290 = vpop.f32.mrf.mxu0
    %v291 = vadd.f32 0.0, %v290
    %292 = vdwg.mxu0
    %293 = vst [vmem:[#allocation7] sm:$0xff] %v169
    %294 = vst [vmem:[#allocation7 + $0x8] sm:$0xff] %v171
    %295 = vst [vmem:[#allocation7 + $0x10] sm:$0xff] %v222
    %296 = vst [vmem:[#allocation7 + $0x18] sm:$0xff] %v224
    %297 = vst [vmem:[#allocation7 + $0x20] sm:$0xff] %v275
    %298 = vst [vmem:[#allocation7 + $0x28] sm:$0xff] %v277
    %299 = vst [vmem:[#allocation7 + $0x30] sm:$0xff] %v173
    %300 = vst [vmem:[#allocation7 + $0x38] sm:$0xff] %v175
    %301 = vst [vmem:[#allocation7 + $0x40] sm:$0xff] %v226
    %302 = vst [vmem:[#allocation7 + $0x48] sm:$0xff] %v228
    %303 = vst [vmem:[#allocation7 + $0x50] sm:$0xff] %v279
    %304 = vst [vmem:[#allocation7 + $0x58] sm:$0xff] %v281
    %305 = vst [vmem:[#allocation7 + $0x60] sm:$0xff] %v179
    %306 = vst [vmem:[#allocation7 + $0x68] sm:$0xff] %v181
    %307 = vst [vmem:[#allocation7 + $0x70] sm:$0xff] %v232
    %308 = vst [vmem:[#allocation7 + $0x78] sm:$0xff] %v234
    %309 = vst [vmem:[#allocation7 + $0x80] sm:$0xff] %v285
    %310 = vst [vmem:[#allocation7 + $0x88] sm:$0xff] %v287
    %311 = vst [vmem:[#allocation7 + $0x90] sm:$0xff] %v183
    %312 = vst [vmem:[#allocation7 + $0x98] sm:$0xff] %v185
    %313 = vst [vmem:[#allocation7 + $0xa0] sm:$0xff] %v236
    %314 = vst [vmem:[#allocation7 + $0xa8] sm:$0xff] %v238
    %315 = vst [vmem:[#allocation7 + $0xb0] sm:$0xff] %v289
    %316 = vst [vmem:[#allocation7 + $0xb8] sm:$0xff] %v291
    // Predicated region
    $region18: #{tpu_custom_call.1} parent=1 // pred_check
      _
    $region19: #{tpu_custom_call.1} parent=1 // pred_check_branch
      %318 = sbr.rel (0) target = $region21
    $region20: #{tpu_custom_call.1} parent=1 // pred_region
      %s320 = ssub.s32 3072, 3072
      %321 = vsyncadd [#allocation4], %s320
      %s322 = sshll.u32 [#allocation7], 4
      %s323 = int_to_ptr.vmem [resolvable:$true] %s322
      %328 = dma.vmem_to_hbm [thread:$0]  %s323, 3072, %s2, [#allocation4], 768, 768, 48
    $region21: #{tpu_custom_call.1} parent=1 // pred_fallthru
      _
    // Predicated region
    $region22: #{tpu_custom_call.1} parent=1 // pred_check
      _
    $region23: #{tpu_custom_call.1} parent=1 // pred_check_branch
      %330 = sbr.rel (0) target = $region25
    $region24: #{tpu_custom_call.1} parent=1 // pred_region
      %331 = dma.done [#allocation4], 3072
    $region25: #{tpu_custom_call.1} parent=1 // pred_fallthru
      _
    %332 = vsyncpa [#allocation3], 1
    %333 = vsyncpa [#allocation6], 1
    %334 = vsyncpa [#allocation4], 1

</llo_original>
